<compile_context>
chip_gen: v7x
topology: tpu7x:2x2x1
jax: 0.10.0
libtpu: 0.0.40
codegen_flags: <defaults>
</compile_context>

<pallas_src>
import functools
import itertools
import math

import jax
import jax.numpy as jnp
import numpy as np
from jax import lax
from jax.experimental import pallas as pl
from jax.experimental.pallas import tpu as pltpu


_VMEM_SOFT_LIMIT = 40 << 20   # safe ceiling on v7x (64 MiB/TC) and below
_BLOCK_BUDGET = 20 << 20      # double-buffered per-step working-set budget


# ----------------------------------------------------------------------------
# Kernels
# ----------------------------------------------------------------------------
def _fused_kernel(x_ref, wt_ref, mt_ref, nmt_ref, b_ref, o_ref, *, mask_constant):
    """One (tm, tn) output tile: mask the (K, tn) weight stripe and matmul."""
    m = mt_ref[...].astype(jnp.float32)
    w_eff = (wt_ref[...].astype(jnp.float32) * m
             + (1.0 - m) * mask_constant * nmt_ref[...].astype(jnp.float32))
    acc = jnp.dot(x_ref[...], w_eff.astype(x_ref.dtype),
                  preferred_element_type=jnp.float32)
    o_ref[...] = (acc + b_ref[...].astype(jnp.float32)).astype(o_ref.dtype)


def _masked_weight_t_kernel(w_ref, m_ref, nm_ref, o_ref, *, mask_constant):
    """W_eff^T tile: mask in f32, transpose once in this mem-bound pass."""
    m = m_ref[...].astype(jnp.float32)
    w_eff = (w_ref[...].astype(jnp.float32) * m
             + (1.0 - m) * mask_constant * nm_ref[...].astype(jnp.float32))
    o_ref[...] = w_eff.T.astype(o_ref.dtype)


def _matmul_bias_kernel(x_ref, wt_ref, b_ref, o_ref, acc_ref):
    """One (tm, tn) tile of y = x @ W_eff^T + bias, accumulated over K tiles."""
    k = pl.program_id(2)

    @pl.when(k == 0)
    def _():
        acc_ref[...] = jnp.zeros_like(acc_ref)

    # Plain (tm, tk) x (tk, tn) — W_eff is already transposed, no in-loop vxpose.
    acc_ref[...] += jnp.dot(x_ref[...], wt_ref[...],
                            preferred_element_type=jnp.float32)

    @pl.when(k == pl.num_programs(2) - 1)
    def _():
        o_ref[...] = (acc_ref[...] + b_ref[...].astype(jnp.float32)).astype(o_ref.dtype)


# ----------------------------------------------------------------------------
# Helpers
# ----------------------------------------------------------------------------
def _round_up(x, m):
    return ((x + m - 1) // m) * m


def _pick_div_tile(padded_dim, preferred):
    # padded_dim is a positive multiple of 128; return the largest preferred
    # tile that divides it (>= 128).
    for t in preferred:
        if t <= padded_dim and padded_dim % t == 0:
            return t
    return min(padded_dim, 128)


def _pick_tm(m):
    # For M < 128 use the full dim (always legal regardless of dtype tiling);
    # otherwise the largest MXU-aligned tile <= M.
    if m < 128:
        return max(int(m), 1)
    for t in (512, 256, 128):
        if m >= t:
            return t
    return 128


# ----------------------------------------------------------------------------
# Large-K fallback: materialize W_eff^T, then (M, N, K)-tiled matmul.
# ----------------------------------------------------------------------------
def _sparse_linear_tiled(x2, weight, mask, normal_mask, bias_row, mask_constant,
                         out_dim):
    M, in_dim = x2.shape
    K_pad = _round_up(in_dim, 128)
    N_pad = bias_row.shape[1]
    xb = np.dtype(x2.dtype).itemsize

    def pad2(a):
        pr, pc = N_pad - a.shape[0], K_pad - a.shape[1]
        return jnp.pad(a, ((0, pr), (0, pc))) if (pr or pc) else a

    w_p, m_p, nm_p = pad2(weight), pad2(mask), pad2(normal_mask)
    # K is the reduction axis: zero padding keeps the contraction exact.
    x_p = jnp.pad(x2, ((0, 0), (0, K_pad - in_dim))) if K_pad != in_dim else x2

    # Kernel 1: HBM-bound masking pass, large lane-dense tiles, transposed out.
    tn1 = _pick_div_tile(N_pad, (512, 256, 128))
    tk1 = _pick_div_tile(K_pad, (1024, 512, 256, 128))
    w_eff_t = pl.pallas_call(
        functools.partial(_masked_weight_t_kernel, mask_constant=mask_constant),
        out_shape=jax.ShapeDtypeStruct((K_pad, N_pad), x2.dtype),
        grid_spec=pltpu.PrefetchScalarGridSpec(
            num_scalar_prefetch=0,
            grid=(N_pad // tn1, K_pad // tk1),
            in_specs=[pl.BlockSpec((tn1, tk1), lambda i, j: (i, j))] * 3,
            out_specs=pl.BlockSpec((tk1, tn1), lambda i, j: (j, i)),
        ),
        compiler_params=pltpu.CompilerParams(
            dimension_semantics=("parallel", "parallel"),
            vmem_limit_bytes=_VMEM_SOFT_LIMIT,
        ),
    )(w_p, m_p, nm_p)

    # Kernel 2: MXU-tiled matmul + bias, K innermost with f32 accumulator.
    tm = _pick_tm(M)
    tn = _pick_div_tile(N_pad, (256, 128))
    tk = _pick_div_tile(K_pad, (512, 256, 128))
    n_i, n_j, n_k = pl.cdiv(M, tm), N_pad // tn, K_pad // tk

    cost = pl.CostEstimate(
        flops=int(2 * M * K_pad * N_pad),
        transcendentals=0,
        bytes_accessed=int(M * K_pad * xb * n_j          # x streamed n_j times
                           + K_pad * N_pad * xb * n_i    # W_eff^T streamed n_i times
                           + M * N_pad * xb + N_pad * xb),
    )

    out_p = pl.pallas_call(
        _matmul_bias_kernel,
        out_shape=jax.ShapeDtypeStruct((M, N_pad), x2.dtype),
        grid_spec=pltpu.PrefetchScalarGridSpec(
            num_scalar_prefetch=0,
            grid=(n_i, n_j, n_k),
            in_specs=[
                pl.BlockSpec((tm, tk), lambda i, j, k: (i, k)),   # x
                pl.BlockSpec((tk, tn), lambda i, j, k: (k, j)),   # W_eff^T
                pl.BlockSpec((1, tn), lambda i, j, k: (0, j)),    # bias
            ],
            out_specs=pl.BlockSpec((tm, tn), lambda i, j, k: (i, j)),
            scratch_shapes=[pltpu.VMEM((tm, tn), jnp.float32)],
        ),
        compiler_params=pltpu.CompilerParams(
            dimension_semantics=("parallel", "parallel", "arbitrary"),
            vmem_limit_bytes=_VMEM_SOFT_LIMIT,
        ),
        cost_estimate=cost,
    )(x_p, w_eff_t, bias_row)
    return out_p[:, :out_dim]


# ----------------------------------------------------------------------------
# Wrapper
# ----------------------------------------------------------------------------
def sparse_linear(x, weight, mask, normal_mask, bias=None, *, mask_constant=1.0):
    """Forward of SparseLinear: x (..., in_dim) -> (..., out_dim)."""
    in_dim = x.shape[-1]
    out_dim, w_in = weight.shape
    assert w_in == in_dim
    assert mask.shape == (out_dim, in_dim)
    assert normal_mask.shape == (out_dim, in_dim)

    x2 = x.reshape(-1, in_dim)
    M = x2.shape[0]
    N_pad = _round_up(out_dim, 128)
    mask_constant = float(mask_constant)

    if bias is None:
        bias = jnp.zeros((out_dim,), dtype=x.dtype)
    bias_row = jnp.pad(bias, (0, N_pad - out_dim)).reshape(1, N_pad)

    xb = np.dtype(x2.dtype).itemsize
    wb = np.dtype(weight.dtype).itemsize

    def fused_block_bytes(tm_, tn_):
        # x tile + 3 weight-sized tiles + out tile, double-buffered.
        return 2 * (tm_ * in_dim * xb + 3 * in_dim * tn_ * wb + tm_ * tn_ * xb)

    if fused_block_bytes(128, 128) > _BLOCK_BUDGET:
        # in_dim too large for full-K blocks: two-kernel tiled-K path.
        out = _sparse_linear_tiled(x2, weight, mask, normal_mask, bias_row,
                                   mask_constant, out_dim)
        return out.reshape(x.shape[:-1] + (out_dim,))

    # -------------------- fused single-kernel path --------------------------
    # Transpose + N-pad the (small) weight-sized operands once in the wrapper
    # so the kernel does a plain (tm, K) x (K, tn) matmul with no in-loop
    # transpose.  x itself is never padded or copied (K is a full block,
    # partial last M block handled by pl.cdiv).
    def tpad(a):
        a_t = a.T  # (in_dim, out_dim)
        if N_pad != out_dim:
            a_t = jnp.pad(a_t, ((0, 0), (0, N_pad - out_dim)))
        return a_t

    wt, mt, nmt = tpad(weight), tpad(mask), tpad(normal_mask)

    tm = _pick_tm(M)
    tn = _pick_div_tile(N_pad, (512, 256, 128))
    while fused_block_bytes(tm, tn) > _BLOCK_BUDGET:
        if tn > 128:
            tn //= 2
        elif tm > 128:
            tm //= 2
        else:
            break
    # v7x has two TensorCores: keep >=2 parallel grid blocks when possible.
    if pl.cdiv(M, tm) == 1 and N_pad // tn == 1 and N_pad % 256 == 0:
        tn = N_pad // 2

    n_i, n_j = pl.cdiv(M, tm), N_pad // tn

    # Pick the grid order that minimizes HBM re-streaming: the operand whose
    # block index is constant along the innermost axis is fetched only once.
    x_stream = M * in_dim * xb
    w_stream = 3 * in_dim * N_pad * wb
    if x_stream + w_stream * n_i <= w_stream + x_stream * n_j:
        grid = (n_i, n_j)                    # j innermost: x streamed once
        x_map = lambda i, j: (i, 0)
        w_map = lambda i, j: (0, j)
        o_map = lambda i, j: (i, j)
        streamed = x_stream + w_stream * n_i
    else:
        grid = (n_j, n_i)                    # i innermost: weights streamed once
        x_map = lambda j, i: (i, 0)
        w_map = lambda j, i: (0, j)
        o_map = lambda j, i: (i, j)
        streamed = w_stream + x_stream * n_j

    cost = pl.CostEstimate(
        flops=int(2 * M * in_dim * N_pad),
        transcendentals=0,
        bytes_accessed=int(streamed + M * N_pad * xb + N_pad * xb),
    )

    out_p = pl.pallas_call(
        functools.partial(_fused_kernel, mask_constant=mask_constant),
        out_shape=jax.ShapeDtypeStruct((M, N_pad), x.dtype),
        grid_spec=pltpu.PrefetchScalarGridSpec(
            num_scalar_prefetch=0,
            grid=grid,
            in_specs=[
                pl.BlockSpec((tm, in_dim), x_map),    # x rows (full K)
                pl.BlockSpec((in_dim, tn), w_map),    # weight^T stripe
                pl.BlockSpec((in_dim, tn), w_map),    # mask^T stripe
                pl.BlockSpec((in_dim, tn), w_map),    # normal_mask^T stripe
                pl.BlockSpec((1, tn), w_map),         # bias
            ],
            out_specs=pl.BlockSpec((tm, tn), o_map),
        ),
        compiler_params=pltpu.CompilerParams(
            dimension_semantics=("parallel", "parallel"),
            vmem_limit_bytes=_VMEM_SOFT_LIMIT,
        ),
        cost_estimate=cost,
    )(x2, wt, mt, nmt, bias_row)

    out = out_p[:, :out_dim]
    return out.reshape(x.shape[:-1] + (out_dim,))


# ----------------------------------------------------------------------------
# Deterministic "densest" mask (same construction as the PyTorch make_mask)
# ----------------------------------------------------------------------------
def make_densest_mask(in_dim, out_dim):
    assert out_dim < 2 ** in_dim and in_dim > 0 and out_dim > 0
    mask = np.ones((out_dim, in_dim), dtype=np.float32)
    if out_dim == 1:
        return mask
    row_idx = 1
    for nz in range(1, in_dim):
        for zeros_in_row in itertools.combinations(range(in_dim), nz):
            mask[row_idx, list(zeros_in_row)] = 0.0
            row_idx += 1
            if row_idx >= out_dim:
                return mask
    return mask


if __name__ == "__main__":
    key = jax.random.PRNGKey(0)
    k_x, k_w, k_nm, k_b = jax.random.split(key, 4)

    batch, seq, in_dim, out_dim = 2, 8, 32, 16
    mask_constant = 1.0

    x = jax.random.normal(k_x, (batch, seq, in_dim), dtype=jnp.float32)

    mask = jnp.asarray(make_densest_mask(in_dim, out_dim))
    # TODO(synk): torch.Generator-seeded normal_mask has no JAX equivalent;
    # it is parameter/buffer data, so a jax.random draw preserves semantics.
    normal_mask = jax.random.normal(k_nm, (out_dim, in_dim), dtype=jnp.float32)

    # kaiming_uniform(a=sqrt(5))-style init, deterministic via PRNGKey(0).
    w_bound = math.sqrt(6.0 / ((1.0 + 5.0) * in_dim))
    weight = jax.random.uniform(
        k_w, (out_dim, in_dim), jnp.float32, minval=-w_bound, maxval=w_bound)
    b_bound = 1.0 / math.sqrt(in_dim)
    bias = jax.random.uniform(
        k_b, (out_dim,), jnp.float32, minval=-b_bound, maxval=b_bound)

    out = sparse_linear(x, weight, mask, normal_mask, bias,
                        mask_constant=mask_constant)
    out = jax.block_until_ready(out)

    # Pure-JAX reference: exactly SparseLinear.forward semantics.
    w_eff_ref = weight * mask + (1.0 - mask) * mask_constant * normal_mask
    ref = jnp.einsum("bsi,oi->bso", x, w_eff_ref) + bias

    assert out.shape == ref.shape and out.dtype == x.dtype
    assert jnp.allclose(out, ref, atol=1e-4, rtol=1e-4), "mismatch vs reference"
    print("KERNEL_OK")
</pallas_src>

<mosaic_0001>
module attributes {stable_mosaic.version = 11 : i64} {
  func.func @_fused_kernel(%arg0: i32, %arg1: i32, %arg2: memref<16x32xf32, #tpu.memory_space<vmem>>, %arg3: memref<32x128xf32, #tpu.memory_space<vmem>>, %arg4: memref<32x128xf32, #tpu.memory_space<vmem>>, %arg5: memref<32x128xf32, #tpu.memory_space<vmem>>, %arg6: memref<1x128xf32, #tpu.memory_space<vmem>>, %arg7: memref<16x128xf32, #tpu.memory_space<vmem>>) attributes {dimension_semantics = [#tpu.dimension_semantics<parallel>, #tpu.dimension_semantics<parallel>], iteration_bounds = array<i64: 1, 1>, scalar_prefetch = 0 : i64, scratch_operands = 0 : i64, tpu.core_type = #tpu.core_type<tc>, window_params = [{transform_indices = @transform_0, window_bounds = array<i64: 16, 32>}, {transform_indices = @transform_1, window_bounds = array<i64: 32, 128>}, {transform_indices = @transform_2, window_bounds = array<i64: 32, 128>}, {transform_indices = @transform_3, window_bounds = array<i64: 32, 128>}, {transform_indices = @transform_4, window_bounds = array<i64: 1, 128>}, {transform_indices = @transform_5, window_bounds = array<i64: 16, 128>}]} {
    %c0 = arith.constant 0 : index
    %c0_0 = arith.constant 0 : index
    %0 = vector.load %arg4[%c0, %c0_0] : memref<32x128xf32, #tpu.memory_space<vmem>>, vector<32x128xf32>
    %c0_1 = arith.constant 0 : index
    %c0_2 = arith.constant 0 : index
    %1 = vector.load %arg3[%c0_1, %c0_2] : memref<32x128xf32, #tpu.memory_space<vmem>>, vector<32x128xf32>
    %2 = arith.mulf %1, %0 : vector<32x128xf32>
    %cst = arith.constant 1.000000e+00 : f32
    %3 = vector.broadcast %cst : f32 to vector<32x128xf32>
    %4 = arith.subf %3, %0 : vector<32x128xf32>
    %cst_3 = arith.constant 1.000000e+00 : f32
    %5 = vector.broadcast %cst_3 : f32 to vector<32x128xf32>
    %6 = arith.mulf %4, %5 : vector<32x128xf32>
    %c0_4 = arith.constant 0 : index
    %c0_5 = arith.constant 0 : index
    %7 = vector.load %arg5[%c0_4, %c0_5] : memref<32x128xf32, #tpu.memory_space<vmem>>, vector<32x128xf32>
    %8 = arith.mulf %6, %7 : vector<32x128xf32>
    %9 = arith.addf %2, %8 : vector<32x128xf32>
    %c0_6 = arith.constant 0 : index
    %c0_7 = arith.constant 0 : index
    %10 = vector.load %arg2[%c0_6, %c0_7] : memref<16x32xf32, #tpu.memory_space<vmem>>, vector<16x32xf32>
    %cst_8 = arith.constant dense<0.000000e+00> : vector<16x128xf32>
    %11 = tpu.matmul %10, %9, %cst_8 {dimension_numbers = #tpu.dot_dimension_numbers<[1], [0], [0], [1], [0, 0, 1, 1], [], []>} : vector<16x32xf32>, vector<32x128xf32>, vector<16x128xf32> -> vector<16x128xf32>
    %c0_9 = arith.constant 0 : index
    %c0_10 = arith.constant 0 : index
    %12 = vector.load %arg6[%c0_9, %c0_10] : memref<1x128xf32, #tpu.memory_space<vmem>>, vector<1x128xf32>
    %13 = vector.broadcast %12 : vector<1x128xf32> to vector<16x128xf32>
    %14 = arith.addf %11, %13 : vector<16x128xf32>
    %c0_11 = arith.constant 0 : index
    %c0_12 = arith.constant 0 : index
    %15 = vector.load %arg7[%c0_11, %c0_12] : memref<16x128xf32, #tpu.memory_space<vmem>>, vector<16x128xf32>
    tpu.vector_store %arg7[%c0_11, %c0_12], %14 {strides = array<i32>} : memref<16x128xf32, #tpu.memory_space<vmem>>, vector<16x128xf32>,
    return
  }
  func.func @transform_0(%arg0: i32, %arg1: i32) -> (i32, i32) {
    %c0_i32 = arith.constant 0 : i32
    %c0_i32_0 = arith.constant 0 : i32
    return %arg0, %c0_i32 : i32, i32
  }
  func.func @transform_1(%arg0: i32, %arg1: i32) -> (i32, i32) {
    %c0_i32 = arith.constant 0 : i32
    %c0_i32_0 = arith.constant 0 : i32
    return %c0_i32, %arg1 : i32, i32
  }
  func.func @transform_2(%arg0: i32, %arg1: i32) -> (i32, i32) {
    %c0_i32 = arith.constant 0 : i32
    %c0_i32_0 = arith.constant 0 : i32
    return %c0_i32, %arg1 : i32, i32
  }
  func.func @transform_3(%arg0: i32, %arg1: i32) -> (i32, i32) {
    %c0_i32 = arith.constant 0 : i32
    %c0_i32_0 = arith.constant 0 : i32
    return %c0_i32, %arg1 : i32, i32
  }
  func.func @transform_4(%arg0: i32, %arg1: i32) -> (i32, i32) {
    %c0_i32 = arith.constant 0 : i32
    %c0_i32_0 = arith.constant 0 : i32
    return %c0_i32, %arg1 : i32, i32
  }
  func.func @transform_5(%arg0: i32, %arg1: i32) -> (i32, i32) {
    %c0_i32 = arith.constant 0 : i32
    return %arg0, %arg1 : i32, i32
  }
}

</mosaic_0001>

<llo_original>
// kernel: tpu_custom_call.1
$region0: #{tpu_custom_call.1}
  #allocation0 [shape = 'u32[]', space=smem, size = 0x4, offset = 0x4, fixed_abs, tag = 'smem constant byte address 0x4 - core index']
  #allocation1 [shape = 'u32[144,128]{1,0:T(1,128)}', space=vmem, size = 0x12000, scoped, tag = 'internal scratch']
  %s0 = inlined_call_operand.hbm [shape: f32[16,32], index: 0, kind: input, shape index: {}]
  %s1 = inlined_call_operand.hbm [shape: f32[32,128], index: 1, kind: input, shape index: {}]
  %s2 = inlined_call_operand.hbm [shape: f32[32,128], index: 2, kind: input, shape index: {}]
  %s3 = inlined_call_operand.hbm [shape: f32[32,128], index: 3, kind: input, shape index: {}]
  %s4 = inlined_call_operand.vmem [shape: f32[1,128], index: 4, kind: input, shape index: {}]
  %s5 = inlined_call_operand.hbm [shape: f32[16,128], index: 5, kind: output, shape index: {}]
  %s6 = sld [smem:[#allocation0]]
  $region46: #{tpu_custom_call.1} parent=0
    _
  %s8 = ssub.s32 1, %s6
  %s9 = scalar_select 0, %s8, %s6
  $region1: #{tpu_custom_call.1} parent=0
    #allocation2 [shape = 'u8[8192]{0}', space=vmem, size = 0x2000, scoped, tag = 'input window, operand 0, single buffered']
    #allocation3 [shape = 's32[1]{0}', space=sflag, size = 0x4, scoped, tag = 'scoped memory for tpu_custom_call.1']
    #allocation4 [shape = 's32[1]{0}', space=sflag, size = 0x4, scoped, tag = 'scoped memory for tpu_custom_call.1']
    #allocation5 [shape = 'u8[16384]{0}', space=vmem, size = 0x4000, scoped, tag = 'input window, operand 1, single buffered']
    #allocation6 [shape = 's32[1]{0}', space=sflag, size = 0x4, scoped, tag = 'scoped memory for tpu_custom_call.1']
    #allocation7 [shape = 'u8[16384]{0}', space=vmem, size = 0x4000, scoped, tag = 'input window, operand 2, single buffered']
    #allocation8 [shape = 'u8[16384]{0}', space=vmem, size = 0x4000, scoped, tag = 'input window, operand 3, single buffered']
    #allocation9 [shape = 's32[1]{0}', space=sflag, size = 0x4, scoped, tag = 'scoped memory for tpu_custom_call.1']
    #allocation10 [shape = 'u8[8192]{0}', space=vmem, size = 0x2000, scoped, tag = 'output window, operand 0, single buffered']
    %10 = vsyncpa [#allocation3], 0
    %11 = vsyncpa [#allocation6], 0
    %12 = vsyncpa [#allocation9], 0
    %13 = vsyncpa [#allocation4], 0
    // Predicated region
    $region2: #{tpu_custom_call.1} parent=1 // pred_check
      _
    $region3: #{tpu_custom_call.1} parent=1 // pred_check_branch
      %15 = sbr.rel (0) target = $region5
    $region4: #{tpu_custom_call.1} parent=1 // pred_region
      %s17 = ssub.s32 256, 256
      %18 = vsyncadd [#allocation3], %s17
      %s19 = sshll.u32 [#allocation2], 4
      %s20 = int_to_ptr.vmem [resolvable:$true] %s19
      %25 = dma.hbm_to_vmem [thread:$0]  %s0, 256, %s20, [#allocation3], 128, 128, 8
    $region5: #{tpu_custom_call.1} parent=1 // pred_fallthru
      _
    // Predicated region
    $region6: #{tpu_custom_call.1} parent=1 // pred_check
      _
    $region7: #{tpu_custom_call.1} parent=1 // pred_check_branch
      %27 = sbr.rel (0) target = $region9
    $region8: #{tpu_custom_call.1} parent=1 // pred_region
      %s29 = ssub.s32 512, 512
      %30 = vsyncadd [#allocation6], %s29
      %s31 = sshll.u32 [#allocation5], 4
      %s32 = int_to_ptr.vmem [resolvable:$true] %s31
      %37 = dma.hbm_to_vmem [thread:$0]  %s1, 512, %s32, [#allocation6], 128, 128, 8
    $region9: #{tpu_custom_call.1} parent=1 // pred_fallthru
      _
    // Predicated region
    $region10: #{tpu_custom_call.1} parent=1 // pred_check
      _
    $region11: #{tpu_custom_call.1} parent=1 // pred_check_branch
      %39 = sbr.rel (0) target = $region13
    $region12: #{tpu_custom_call.1} parent=1 // pred_region
      %s41 = ssub.s32 512, 512
      %42 = vsyncadd [#allocation6], %s41
      %s43 = sshll.u32 [#allocation7], 4
      %s44 = int_to_ptr.vmem [resolvable:$true] %s43
      %49 = dma.hbm_to_vmem [thread:$0]  %s2, 512, %s44, [#allocation6], 128, 128, 8
    $region13: #{tpu_custom_call.1} parent=1 // pred_fallthru
      _
    // Predicated region
    $region14: #{tpu_custom_call.1} parent=1 // pred_check
      _
    $region15: #{tpu_custom_call.1} parent=1 // pred_check_branch
      %51 = sbr.rel (0) target = $region17
    $region16: #{tpu_custom_call.1} parent=1 // pred_region
      %s53 = ssub.s32 512, 512
      %54 = vsyncadd [#allocation9], %s53
      %s55 = sshll.u32 [#allocation8], 4
      %s56 = int_to_ptr.vmem [resolvable:$true] %s55
      %61 = dma.hbm_to_vmem [thread:$0]  %s3, 512, %s56, [#allocation9], 128, 128, 8
    $region17: #{tpu_custom_call.1} parent=1 // pred_fallthru
      _
    // Predicated region
    $region18: #{tpu_custom_call.1} parent=1 // pred_check
      _
    $region19: #{tpu_custom_call.1} parent=1 // pred_check_branch
      %63 = sbr.rel (0) target = $region21
    $region20: #{tpu_custom_call.1} parent=1 // pred_region
      _
    $region21: #{tpu_custom_call.1} parent=1 // pred_fallthru
      _
    // Predicated region
    $region22: #{tpu_custom_call.1} parent=1 // pred_check
      _
    $region23: #{tpu_custom_call.1} parent=1 // pred_check_branch
      %65 = sbr.rel (0) target = $region25
    $region24: #{tpu_custom_call.1} parent=1 // pred_region
      %66 = dma.done [#allocation3], 256
    $region25: #{tpu_custom_call.1} parent=1 // pred_fallthru
      _
    // Predicated region
    $region26: #{tpu_custom_call.1} parent=1 // pred_check
      _
    $region27: #{tpu_custom_call.1} parent=1 // pred_check_branch
      %68 = sbr.rel (0) target = $region29
    $region28: #{tpu_custom_call.1} parent=1 // pred_region
      %69 = dma.done [#allocation6], 512
    $region29: #{tpu_custom_call.1} parent=1 // pred_fallthru
      _
    // Predicated region
    $region30: #{tpu_custom_call.1} parent=1 // pred_check
      _
    $region31: #{tpu_custom_call.1} parent=1 // pred_check_branch
      %71 = sbr.rel (0) target = $region33
    $region32: #{tpu_custom_call.1} parent=1 // pred_region
      %72 = dma.done [#allocation6], 512
    $region33: #{tpu_custom_call.1} parent=1 // pred_fallthru
      _
    // Predicated region
    $region34: #{tpu_custom_call.1} parent=1 // pred_check
      _
    $region35: #{tpu_custom_call.1} parent=1 // pred_check_branch
      %74 = sbr.rel (0) target = $region37
    $region36: #{tpu_custom_call.1} parent=1 // pred_region
      %75 = dma.done [#allocation9], 512
    $region37: #{tpu_custom_call.1} parent=1 // pred_fallthru
      _
    %v76 = vld [vmem:[#allocation7] sm:$0xff]
    %v77 = vld [vmem:[#allocation7 + $0x8] sm:$0xff]
    %v78 = vld [vmem:[#allocation7 + $0x10] sm:$0xff]
    %v79 = vld [vmem:[#allocation7 + $0x18] sm:$0xff]
    %v80 = vld [vmem:[#allocation5] sm:$0xff]
    %v81 = vld [vmem:[#allocation5 + $0x8] sm:$0xff]
    %v82 = vld [vmem:[#allocation5 + $0x10] sm:$0xff]
    %v83 = vld [vmem:[#allocation5 + $0x18] sm:$0xff]
    %v84 = vmul.f32 %v80, %v76
    %v85 = vmul.f32 %v81, %v77
    %v86 = vmul.f32 %v82, %v78
    %v87 = vmul.f32 %v83, %v79
    %v88 = vsub.f32 1.0, %v76
    %v89 = vsub.f32 1.0, %v77
    %v90 = vsub.f32 1.0, %v78
    %v91 = vsub.f32 1.0, %v79
    %v92 = vld [vmem:[#allocation8] sm:$0xff]
    %v93 = vld [vmem:[#allocation8 + $0x8] sm:$0xff]
    %v94 = vld [vmem:[#allocation8 + $0x10] sm:$0xff]
    %v95 = vld [vmem:[#allocation8 + $0x18] sm:$0xff]
    %v96 = vmul.f32 %v88, %v92
    %v97 = vmul.f32 %v89, %v93
    %v98 = vmul.f32 %v90, %v94
    %v99 = vmul.f32 %v91, %v95
    %v100 = vadd.f32 %v84, %v96
    %v101 = vadd.f32 %v85, %v97
    %v102 = vadd.f32 %v86, %v98
    %v103 = vadd.f32 %v87, %v99
    %v104 = vld [vmem:[#allocation2] sm:$0xff]
    %v105 = vld [vmem:[#allocation2 + $0x8] sm:$0xff]
    %v106 = vld [vmem:[%s4] sm:$0x1]
    %v108 = vlaneseq
    %v109 = vshrl.u32 %v108, 7
    %v110 = vsub.s32 0, %v109
    %v111 = vrot.slane %v106, %v110
    %vm113 = vcmask 261120
    %v115 = vsel %vm113, %v104, 0
    %v118 = vsel %vm113, %v105, 0
    %120 = vmatprep.subr.mxu0 0.0
    %121 = vmatpush1.msra.mxu0 %v100
    %122 = vmatprep.subr.mxu0 0.0
    %123 = vmatpush1.msra.mxu0 %v101
    %124 = vmatprep.subr.mxu0 0.0
    %125 = vmatpush1.msra.mxu0 %v102
    %126 = vmatprep.subr.mxu0 0.0
    %127 = vmatpush1.msra.mxu0 %v103
    %128 = vmatprep.subr.mxu0 0.0
    %129 = vmatpush1.msra.mxu0 0.0
    %130 = vmatprep.subr.mxu0 0.0
    %131 = vmatpush1.msra.mxu0 0.0
    %132 = vmatprep.subr.mxu0 0.0
    %133 = vmatpush1.msra.mxu0 0.0
    %134 = vmatprep.subr.mxu0 0.0
    %135 = vmatpush1.msra.mxu0 0.0
    %136 = vmatprep.subr.mxu0 0.0
    %137 = vmatpush1.msra.mxu0 0.0
    %138 = vmatprep.subr.mxu0 0.0
    %139 = vmatpush1.msra.mxu0 0.0
    %140 = vmatprep.subr.mxu0 0.0
    %141 = vmatpush1.msra.mxu0 0.0
    %142 = vmatprep.subr.mxu0 0.0
    %143 = vmatpush1.msra.mxu0 0.0
    %144 = vmatprep.subr.mxu0 0.0
    %145 = vmatpush1.msra.mxu0 0.0
    %146 = vmatprep.subr.mxu0 0.0
    %147 = vmatpush1.msra.mxu0 0.0
    %148 = vmatprep.subr.mxu0 0.0
    %149 = vmatpush1.msra.mxu0 0.0
    %150 = vmatprep.subr.mxu0 0.0
    %151 = vmatpush1.msra.mxu0 0.0
    %152 = vmatprep.subr.mxu0 0.0
    %153 = vmatpush1.msra.mxu0 0.0
    %154 = vmatprep.subr.mxu0 0.0
    %155 = vmatpush1.msra.mxu0 0.0
    %156 = vmatprep.subr.mxu0 0.0
    %157 = vmatpush1.msra.mxu0 0.0
    %158 = vmatprep.subr.mxu0 0.0
    %159 = vmatpush1.msra.mxu0 0.0
    %160 = vmatprep.subr.mxu0 0.0
    %161 = vmatpush1.msra.mxu0 0.0
    %162 = vmatprep.subr.mxu0 0.0
    %163 = vmatpush1.msra.mxu0 0.0
    %164 = vmatprep.subr.mxu0 0.0
    %165 = vmatpush1.msra.mxu0 0.0
    %166 = vmatprep.subr.mxu0 0.0
    %167 = vmatpush1.msra.mxu0 0.0
    %168 = vmatprep.subr.mxu0 0.0
    %169 = vmatpush1.msra.mxu0 0.0
    %170 = vmatprep.subr.mxu0 0.0
    %171 = vmatpush1.msra.mxu0 0.0
    %172 = vmatprep.subr.mxu0 0.0
    %173 = vmatpush1.msra.mxu0 0.0
    %174 = vmatprep.subr.mxu0 0.0
    %175 = vmatpush1.msra.mxu0 0.0
    %176 = vmatprep.subr.mxu0 0.0
    %177 = vmatpush1.msra.mxu0 0.0
    %178 = vmatprep.subr.mxu0 0.0
    %179 = vmatpush1.msra.mxu0 0.0
    %180 = vmatprep.subr.mxu0 0.0
    %181 = vmatpush1.msra.mxu0 0.0
    %182 = vmatprep.subr.mxu0 0.0
    %183 = vmatpush1.msra.mxu0 0.0
    %184 = vmatprep.mubr.f32.mxu0 0.0
    %185 = vmatmul.mubr.f32.gmra.mrb[0].mxu0 %v115
    %v186 = vpop.f32.mrb[0].mxu0
    %v187 = vadd.f32 %v111, %v186
    %v188 = vpop.f32.mrb[0].mxu0
    %189 = vmatprep.mubr.f32.mxu0 0.0
    %190 = vmatmul.mubr.f32.gmra.mrb[0].mxu0 %v118
    %v191 = vpop.f32.mrb[0].mxu0
    %v192 = vadd.f32 %v111, %v191
    %v193 = vpop.f32.mrb[0].mxu0
    %194 = vdwg.mxu0
    %195 = vst [vmem:[#allocation10] sm:$0xff] %v187
    %196 = vst [vmem:[#allocation10 + $0x8] sm:$0xff] %v192
    // Predicated region
    $region38: #{tpu_custom_call.1} parent=1 // pred_check
      _
    $region39: #{tpu_custom_call.1} parent=1 // pred_check_branch
      %198 = sbr.rel (0) target = $region41
    $region40: #{tpu_custom_call.1} parent=1 // pred_region
      %s200 = ssub.s32 256, 256
      %201 = vsyncadd [#allocation4], %s200
      %s202 = sshll.u32 [#allocation10], 4
      %s203 = int_to_ptr.vmem [resolvable:$true] %s202
      %208 = dma.vmem_to_hbm [thread:$0]  %s203, 256, %s5, [#allocation4], 128, 128, 8
    $region41: #{tpu_custom_call.1} parent=1 // pred_fallthru
      _
    // Predicated region
    $region42: #{tpu_custom_call.1} parent=1 // pred_check
      _
    $region43: #{tpu_custom_call.1} parent=1 // pred_check_branch
      %210 = sbr.rel (0) target = $region45
    $region44: #{tpu_custom_call.1} parent=1 // pred_region
      %211 = dma.done [#allocation4], 256
    $region45: #{tpu_custom_call.1} parent=1 // pred_fallthru
      _
    %212 = vsyncpa [#allocation3], 1
    %213 = vsyncpa [#allocation6], 1
    %214 = vsyncpa [#allocation9], 1
    %215 = vsyncpa [#allocation4], 1

</llo_original>
